<compile_context>
chip_gen: v7x
topology: tpu7x:2x2x1
jax: 0.10.0
libtpu: 0.0.40
codegen_flags: <defaults>
</compile_context>

<pallas_src>
import jax
import jax.numpy as jnp
from jax.experimental import pallas as pl
from jax.experimental.pallas import tpu as pltpu


def _round_up(n: int, m: int) -> int:
    return (n + m - 1) // m * m


def _ode_func_kernel(t_ref, x_ref, w_ref, aux_ref, out_ref):
    """One fused MXU matmul + VPU/EUP epilogue; operands in VMEM/SMEM."""
    dp2 = w_ref.shape[1]                  # 2 * Dp (lane-padded slab width)
    dp = dp2 // 2
    out_f = out_ref.shape[1]              # real (unpadded) out_features
    t = t_ref[0, 0]                       # scalar time from SMEM

    # Fold the time column of each Linear into an effective bias, combined
    # with the real bias ONCE on a [1, 2*Dp] vector:
    #   [x, t] @ W + b = x @ W[:Din] + (b + t * W[Din])
    bias_eff = aux_ref[0:1, :] + t * aux_ref[1:2, :]      # [1, 2*Dp]

    # Single MXU push:  x @ [Wl_x | Wn_x]  ->  [tm, 2*Dp]
    y = jnp.dot(x_ref[...], w_ref[...], preferred_element_type=jnp.float32)
    y = y + bias_eff                                       # one broadcast-add

    lin = y[:, :dp]                        # lane-boundary slices (dp % 128 == 0)
    non = jnp.tanh(y[:, dp:])              # EUP
    gate = aux_ref[2:3, :dp]               # [1, Dp]
    res = lin + gate * non                 # [tm, Dp]

    # Store only the real out_features columns (unpadded output in HBM).
    out_ref[...] = res[:, :out_f].astype(out_ref.dtype)


def _pick_tiles(B, d_in, dp2, out_f, *, row_cap=1024, vmem_budget=24 << 20):
    """Balanced batch tiling under a VMEM budget, v7x 2-TC aware."""
    # Per-row bytes: double-buffered x/out tiles + [tm, 2*Dp] f32 intermediate.
    per_row = 4 * (2 * d_in + 2 * out_f + 2 * dp2)
    # Fixed bytes: resident weight + aux slabs (counted double-buffered).
    fixed = 4 * 2 * (d_in * dp2 + 8 * dp2)
    budget_rows = max(8, (vmem_budget - fixed) // per_row)
    cap = max(8, min(row_cap, (budget_rows // 8) * 8))

    n_tiles = -(-B // cap)
    if n_tiles == 1 and B >= 256:
        n_tiles = 2            # ensure >=2 grid steps so v7x's 2nd TC gets work
    tm = _round_up(-(-B // n_tiles), 8)
    nb = -(-B // tm)
    return tm, nb


def general_ode_func(t, x, packed, out_features):
    """JAX wrapper mirroring GeneralODEFunc.forward(t, x).

    t: scalar time
    x: [B, in_features] float32
    packed: dict from pack_params() with the kernel-layout weights.
    """
    B, d_in = x.shape
    w = packed["w_packed"]                # [Din, 2*Dp]
    aux = packed["aux"]                   # [8,   2*Dp]
    dp2 = w.shape[1]

    tm, nb = _pick_tiles(B, d_in, dp2, out_features)
    b_pad = nb * tm
    if b_pad != B:
        x = jnp.pad(x, ((0, b_pad - B), (0, 0)))

    # Explicit scoped-VMEM limit (v5e default is only 16 MiB; keep <= v7x's
    # 64 MiB physical VMEM).
    vmem_needed = 4 * (2 * tm * d_in + 2 * tm * out_features + 2 * tm * dp2
                       + 2 * d_in * dp2 + 2 * 8 * dp2)
    vmem_limit = int(min(max(2 * vmem_needed, 32 << 20), 64 << 20))

    t_arr = jnp.asarray(t, dtype=jnp.float32).reshape(1, 1)

    out = pl.pallas_call(
        _ode_func_kernel,
        out_shape=jax.ShapeDtypeStruct((b_pad, out_features), x.dtype),
        grid_spec=pltpu.PrefetchScalarGridSpec(
            num_scalar_prefetch=0,
            grid=(nb,),
            in_specs=[
                # scalar t -> SMEM (no VMEM tile, no concat in HBM)
                pl.BlockSpec(memory_space=pltpu.MemorySpace.SMEM),
                # activations: tiled over the batch grid axis
                pl.BlockSpec((tm, d_in), lambda i: (i, 0)),
                # packed weights + aux: constant index_map -> resident in VMEM
                pl.BlockSpec((d_in, dp2), lambda i: (0, 0)),
                pl.BlockSpec((8, dp2), lambda i: (0, 0)),
            ],
            # Unpadded output: last dim equals the full array dim (legal even
            # for out_features < 128) -> no 8x write amplification.
            out_specs=pl.BlockSpec((tm, out_features), lambda i: (i, 0)),
        ),
        compiler_params=pltpu.CompilerParams(
            dimension_semantics=("parallel",),   # megacore / v7x 2-TC sharding
            vmem_limit_bytes=vmem_limit,
        ),
    )(t_arr, x, w, aux)

    # Only the padded batch rows (if any) need slicing; feature dim is exact.
    if b_pad != B:
        out = out[:B]
    return out

    # TODO(synk): when this is evaluated per-stage inside an ODE solver at tiny
    # B, fuse multiple stage evaluations into one pallas_call (grid over
    # stages, per-stage t via scalar prefetch) -- per-call dispatch dominates
    # wall-clock at B=8.


def init_params(key, in_features, out_features):
    """PyTorch-shape-equivalent parameters, stored transposed ([in+1, out])."""
    k1, k2, k3, k4 = jax.random.split(key, 4)
    fan_in = in_features + 1
    bound = 1.0 / (fan_in ** 0.5)
    wl = jax.random.uniform(k1, (fan_in, out_features), jnp.float32, -bound, bound)
    bl = jax.random.uniform(k2, (1, out_features), jnp.float32, -bound, bound)
    wn = jax.random.uniform(k3, (fan_in, out_features), jnp.float32, -bound, bound)
    bn = jax.random.uniform(k4, (1, out_features), jnp.float32, -bound, bound)
    gate = jnp.ones((1, out_features), jnp.float32)  # Parameter(torch.ones(out_features))
    return {"wl": wl, "bl": bl, "wn": wn, "bn": bn, "gate": gate}


def pack_params(raw, in_features, out_features, weight_dtype=jnp.float32):
    """Pack into the kernel layout:
       w_packed [Din, 2*Dp]  = [ Wl[:Din] | Wn[:Din] ]  (lane-padded slabs)
       aux      [8,   2*Dp]  : row0 = (bl | bn), row1 = (Wl[Din] | Wn[Din]),
                               row2 = (gate | 0).
       weight_dtype=jnp.bfloat16 halves weight VMEM/DMA if ever needed.
    """
    dp = _round_up(max(out_features, 1), 128)
    wl, wn = raw["wl"], raw["wn"]

    w_packed = jnp.zeros((in_features, 2 * dp), jnp.float32)
    w_packed = w_packed.at[:, :out_features].set(wl[:in_features])
    w_packed = w_packed.at[:, dp:dp + out_features].set(wn[:in_features])

    aux = jnp.zeros((8, 2 * dp), jnp.float32)
    aux = aux.at[0, :out_features].set(raw["bl"][0])
    aux = aux.at[0, dp:dp + out_features].set(raw["bn"][0])
    aux = aux.at[1, :out_features].set(wl[in_features])
    aux = aux.at[1, dp:dp + out_features].set(wn[in_features])
    aux = aux.at[2, :out_features].set(raw["gate"][0])
    return {"w_packed": w_packed.astype(weight_dtype), "aux": aux}


def general_ode_func_ref(t, x, raw):
    """Pure-JAX reference (mirrors the PyTorch forward exactly)."""
    t_expanded = jnp.full((x.shape[0], 1), t, dtype=x.dtype)
    x_t = jnp.concatenate([x, t_expanded], axis=1)
    lin = x_t @ raw["wl"] + raw["bl"]
    non = jnp.tanh(x_t @ raw["wn"] + raw["bn"])
    return lin + raw["gate"] * non


if __name__ == "__main__":
    in_features = 16
    out_features = 16
    hidden_size = 32   # unused by the module's forward (kept for signature parity)
    batch = 8

    key = jax.random.PRNGKey(0)
    kx, kp = jax.random.split(key)
    x = jax.random.normal(kx, (batch, in_features), jnp.float32)
    t = 0.5

    raw = init_params(kp, in_features, out_features)
    packed = pack_params(raw, in_features, out_features)

    out = general_ode_func(t, x, packed, out_features)
    out = jax.block_until_ready(out)

    ref = general_ode_func_ref(t, x, raw)
    assert out.shape == (batch, out_features)
    assert jnp.allclose(out, ref, atol=1e-5, rtol=1e-5), "mismatch vs reference"

    print("KERNEL_OK")
</pallas_src>

<mosaic_0001>
module attributes {stable_mosaic.version = 11 : i64} {
  func.func @_ode_func_kernel(%arg0: i32, %arg1: memref<1x1xf32, #tpu.memory_space<smem>>, %arg2: memref<8x16xf32, #tpu.memory_space<vmem>>, %arg3: memref<16x256xf32, #tpu.memory_space<vmem>>, %arg4: memref<8x256xf32, #tpu.memory_space<vmem>>, %arg5: memref<8x16xf32, #tpu.memory_space<vmem>>) attributes {dimension_semantics = [#tpu.dimension_semantics<parallel>], iteration_bounds = array<i64: 1>, scalar_prefetch = 0 : i64, scratch_operands = 0 : i64, tpu.core_type = #tpu.core_type<tc>, window_params = [{transform_indices = @transform_0, window_bounds = array<i64: 1, 1>}, {transform_indices = @transform_1, window_bounds = array<i64: 8, 16>}, {pipeline_mode = #tpu.pipeline_mode<synchronous>, transform_indices = @transform_2, window_bounds = array<i64: 16, 256>}, {pipeline_mode = #tpu.pipeline_mode<synchronous>, transform_indices = @transform_3, window_bounds = array<i64: 8, 256>}, {transform_indices = @transform_4, window_bounds = array<i64: 8, 16>}]} {
    %c0 = arith.constant 0 : index
    %c0_0 = arith.constant 0 : index
    %0 = memref.load %arg1[%c0, %c0_0] : memref<1x1xf32, #tpu.memory_space<smem>>
    %c0_1 = arith.constant 0 : index
    %c0_2 = arith.constant 0 : index
    %1 = vector.load %arg4[%c0_1, %c0_2] : memref<8x256xf32, #tpu.memory_space<vmem>>, vector<1x256xf32>
    %c1 = arith.constant 1 : index
    %c0_3 = arith.constant 0 : index
    %2 = vector.load %arg4[%c1, %c0_3] : memref<8x256xf32, #tpu.memory_space<vmem>>, vector<1x256xf32>
    %3 = vector.broadcast %0 : f32 to vector<1x256xf32>
    %4 = arith.mulf %3, %2 : vector<1x256xf32>
    %5 = arith.addf %1, %4 : vector<1x256xf32>
    %c0_4 = arith.constant 0 : index
    %c0_5 = arith.constant 0 : index
    %6 = vector.load %arg2[%c0_4, %c0_5] : memref<8x16xf32, #tpu.memory_space<vmem>>, vector<8x16xf32>
    %c0_6 = arith.constant 0 : index
    %c0_7 = arith.constant 0 : index
    %7 = vector.load %arg3[%c0_6, %c0_7] : memref<16x256xf32, #tpu.memory_space<vmem>>, vector<16x256xf32>
    %cst = arith.constant dense<0.000000e+00> : vector<8x256xf32>
    %8 = tpu.matmul %6, %7, %cst {dimension_numbers = #tpu.dot_dimension_numbers<[1], [0], [0], [1], [0, 0, 1, 1], [], []>} : vector<8x16xf32>, vector<16x256xf32>, vector<8x256xf32> -> vector<8x256xf32>
    %9 = vector.broadcast %5 : vector<1x256xf32> to vector<8x256xf32>
    %10 = arith.addf %8, %9 : vector<8x256xf32>
    %11 = vector.extract_strided_slice %10 {offsets = [0, 0], sizes = [8, 128], strides = [1, 1]} : vector<8x256xf32> to vector<8x128xf32>
    %12 = vector.extract_strided_slice %10 {offsets = [0, 128], sizes = [8, 128], strides = [1, 1]} : vector<8x256xf32> to vector<8x128xf32>
    %13 = math.tanh %12 : vector<8x128xf32>
    %c2 = arith.constant 2 : index
    %c0_8 = arith.constant 0 : index
    %14 = vector.load %arg4[%c2, %c0_8] : memref<8x256xf32, #tpu.memory_space<vmem>>, vector<1x128xf32>
    %15 = vector.broadcast %14 : vector<1x128xf32> to vector<8x128xf32>
    %16 = arith.mulf %15, %13 : vector<8x128xf32>
    %17 = arith.addf %11, %16 : vector<8x128xf32>
    %18 = vector.extract_strided_slice %17 {offsets = [0, 0], sizes = [8, 16], strides = [1, 1]} : vector<8x128xf32> to vector<8x16xf32>
    %c0_9 = arith.constant 0 : index
    %c0_10 = arith.constant 0 : index
    %19 = vector.load %arg5[%c0_9, %c0_10] : memref<8x16xf32, #tpu.memory_space<vmem>>, vector<8x16xf32>
    tpu.vector_store %arg5[%c0_9, %c0_10], %18 {strides = array<i32>} : memref<8x16xf32, #tpu.memory_space<vmem>>, vector<8x16xf32>,
    return
  }
  func.func @transform_0(%arg0: i32) -> (i32, i32) {
    %c0_i32 = arith.constant 0 : i32
    %c0_i32_0 = arith.constant 0 : i32
    %c0_i32_1 = arith.constant 0 : i32
    return %c0_i32, %c0_i32_0 : i32, i32
  }
  func.func @transform_1(%arg0: i32) -> (i32, i32) {
    %c0_i32 = arith.constant 0 : i32
    %c0_i32_0 = arith.constant 0 : i32
    return %arg0, %c0_i32 : i32, i32
  }
  func.func @transform_2(%arg0: i32) -> (i32, i32) {
    %c0_i32 = arith.constant 0 : i32
    %c0_i32_0 = arith.constant 0 : i32
    %c0_i32_1 = arith.constant 0 : i32
    return %c0_i32, %c0_i32_0 : i32, i32
  }
  func.func @transform_3(%arg0: i32) -> (i32, i32) {
    %c0_i32 = arith.constant 0 : i32
    %c0_i32_0 = arith.constant 0 : i32
    %c0_i32_1 = arith.constant 0 : i32
    return %c0_i32, %c0_i32_0 : i32, i32
  }
  func.func @transform_4(%arg0: i32) -> (i32, i32) {
    %c0_i32 = arith.constant 0 : i32
    %c0_i32_0 = arith.constant 0 : i32
    return %arg0, %c0_i32 : i32, i32
  }
}

</mosaic_0001>

<llo_original>
// kernel: tpu_custom_call.1
$region0: #{tpu_custom_call.1}
  #allocation0 [shape = 'u32[]', space=smem, size = 0x4, offset = 0x4, fixed_abs, tag = 'smem constant byte address 0x4 - core index']
  #allocation1 [shape = 'u32[144,128]{1,0:T(1,128)}', space=vmem, size = 0x12000, scoped, tag = 'internal scratch']
  #allocation2 [shape = 'f32[1,1]{1,0:T(1,128)S(6)}', space=smem, size = 0x200, scoped, tag = 'scoped memory for tpu_custom_call.1']
  %s0 = inlined_call_operand.<no memory space> [shape: f32[1,1], index: 0, kind: input, shape index: {}]
  %s1 = inlined_call_operand.hbm [shape: f32[8,16], index: 1, kind: input, shape index: {}]
  %s2 = inlined_call_operand.hbm [shape: f32[16,256], index: 2, kind: input, shape index: {}]
  %s3 = inlined_call_operand.hbm [shape: f32[8,256], index: 3, kind: input, shape index: {}]
  %s4 = inlined_call_operand.hbm [shape: f32[8,16], index: 4, kind: output, shape index: {}]
  %s5 = sld [smem:[#allocation0]]
  $region38: #{tpu_custom_call.1} parent=0
    _
  %s7 = ssub.s32 1, %s5
  %s8 = scalar_select 0, %s7, %s5
  %9 = sst [smem:[#allocation2]] %s0
  $region1: #{tpu_custom_call.1} parent=0
    #allocation3 [shape = 'u8[4096]{0}', space=vmem, size = 0x1000, scoped, tag = 'input window, operand 1, single buffered']
    #allocation4 [shape = 's32[1]{0}', space=sflag, size = 0x4, scoped, tag = 'scoped memory for tpu_custom_call.1']
    #allocation5 [shape = 's32[1]{0}', space=sflag, size = 0x4, scoped, tag = 'scoped memory for tpu_custom_call.1']
    #allocation6 [shape = 'u8[16384]{0}', space=vmem, size = 0x4000, scoped, tag = 'input window, operand 2, single buffered']
    #allocation7 [shape = 's32[1]{0}', space=sflag, size = 0x4, scoped, tag = 'scoped memory for tpu_custom_call.1']
    #allocation8 [shape = 'u8[8192]{0}', space=vmem, size = 0x2000, scoped, tag = 'input window, operand 3, single buffered']
    #allocation9 [shape = 'u8[4096]{0}', space=vmem, size = 0x1000, scoped, tag = 'output window, operand 0, single buffered']
    %10 = vsyncpa [#allocation4], 0
    %11 = vsyncpa [#allocation7], 0
    %12 = vsyncpa [#allocation5], 0
    // Predicated region
    $region2: #{tpu_custom_call.1} parent=1 // pred_check
      _
    $region3: #{tpu_custom_call.1} parent=1 // pred_check_branch
      %14 = sbr.rel (0) target = $region5
    $region4: #{tpu_custom_call.1} parent=1 // pred_region
      _
    $region5: #{tpu_custom_call.1} parent=1 // pred_fallthru
      _
    // Predicated region
    $region6: #{tpu_custom_call.1} parent=1 // pred_check
      _
    $region7: #{tpu_custom_call.1} parent=1 // pred_check_branch
      %16 = sbr.rel (0) target = $region9
    $region8: #{tpu_custom_call.1} parent=1 // pred_region
      %s18 = ssub.s32 128, 128
      %19 = vsyncadd [#allocation4], %s18
      %s21 = sshll.u32 [#allocation3], 4
      %s22 = int_to_ptr.vmem [resolvable:$true] %s21
      %24 = dma.hbm_to_vmem [thread:$0]  %s1, 128, %s22, [#allocation4]
    $region9: #{tpu_custom_call.1} parent=1 // pred_fallthru
      _
    // Predicated region
    $region10: #{tpu_custom_call.1} parent=1 // pred_check
      _
    $region11: #{tpu_custom_call.1} parent=1 // pred_check_branch
      %26 = sbr.rel (0) target = $region13
    $region12: #{tpu_custom_call.1} parent=1 // pred_region
      %s28 = ssub.s32 512, 512
      %29 = vsyncadd [#allocation7], %s28
      %s30 = sshll.u32 [#allocation6], 4
      %s31 = int_to_ptr.vmem [resolvable:$true] %s30
      %36 = dma.hbm_to_vmem [thread:$0]  %s2, 512, %s31, [#allocation7], 256, 256, 16
    $region13: #{tpu_custom_call.1} parent=1 // pred_fallthru
      _
    // Predicated region
    $region14: #{tpu_custom_call.1} parent=1 // pred_check
      _
    $region15: #{tpu_custom_call.1} parent=1 // pred_check_branch
      %38 = sbr.rel (0) target = $region17
    $region16: #{tpu_custom_call.1} parent=1 // pred_region
      %s40 = ssub.s32 256, 256
      %41 = vsyncadd [#allocation7], %s40
      %s43 = sshll.u32 [#allocation8], 4
      %s44 = int_to_ptr.vmem [resolvable:$true] %s43
      %46 = dma.hbm_to_vmem [thread:$0]  %s3, 256, %s44, [#allocation7]
    $region17: #{tpu_custom_call.1} parent=1 // pred_fallthru
      _
    // Predicated region
    $region18: #{tpu_custom_call.1} parent=1 // pred_check
      _
    $region19: #{tpu_custom_call.1} parent=1 // pred_check_branch
      %48 = sbr.rel (0) target = $region21
    $region20: #{tpu_custom_call.1} parent=1 // pred_region
      %49 = dma.done [#allocation4], 128
    $region21: #{tpu_custom_call.1} parent=1 // pred_fallthru
      _
    // Predicated region
    $region22: #{tpu_custom_call.1} parent=1 // pred_check
      _
    $region23: #{tpu_custom_call.1} parent=1 // pred_check_branch
      %51 = sbr.rel (0) target = $region25
    $region24: #{tpu_custom_call.1} parent=1 // pred_region
      %52 = dma.done [#allocation7], 512
    $region25: #{tpu_custom_call.1} parent=1 // pred_fallthru
      _
    // Predicated region
    $region26: #{tpu_custom_call.1} parent=1 // pred_check
      _
    $region27: #{tpu_custom_call.1} parent=1 // pred_check_branch
      %54 = sbr.rel (0) target = $region29
    $region28: #{tpu_custom_call.1} parent=1 // pred_region
      %55 = dma.done [#allocation7], 256
    $region29: #{tpu_custom_call.1} parent=1 // pred_fallthru
      _
    %s56 = sld [smem:[#allocation2]]
    %v57 = vld [vmem:[#allocation8] ss:$8 sm:$0x3]
    %s58 = scalar_lea.vmem [#allocation8], 1
    %v59 = vld [vmem:[%s58] ss:$8 sm:$0x3]
    %v60 = vstv %s56
    %v61 = vmul.f32 %v60, %v59
    %v62 = vadd.f32 %v57, %v61
    %v63 = vld [vmem:[#allocation3] sm:$0xff]
    %v64 = vld [vmem:[#allocation6] sm:$0xff]
    %v65 = vld [vmem:[#allocation6 + $0x8] sm:$0xff]
    %v66 = vld [vmem:[#allocation6 + $0x10] sm:$0xff]
    %v67 = vld [vmem:[#allocation6 + $0x18] sm:$0xff]
    %v69 = vlaneseq
    %v70 = vshrl.u32 %v69, 7
    %v71 = vsub.s32 0, %v70
    %v72 = vrot.slane %v62, %v71
    %v73 = vlaneseq
    %v74 = vshrl.u32 %v73, 7
    %v75 = vsub.s32 1, %v74
    %v76 = vrot.slane %v62, %v75
    %vm79 = vcmask 130048
    %v81 = vsel %vm79, %v63, 0
    %83 = vmatprep.subr.mxu0 %v65
    %84 = vmatpush1.msra.mxu0 %v64
    %85 = vmatprep.subr.mxu0 %v67
    %86 = vmatpush1.msra.mxu0 %v66
    %87 = vmatprep.subr.mxu0 0.0
    %88 = vmatpush1.msra.mxu0 0.0
    %89 = vmatprep.subr.mxu0 0.0
    %90 = vmatpush1.msra.mxu0 0.0
    %91 = vmatprep.subr.mxu0 0.0
    %92 = vmatpush1.msra.mxu0 0.0
    %93 = vmatprep.subr.mxu0 0.0
    %94 = vmatpush1.msra.mxu0 0.0
    %95 = vmatprep.subr.mxu0 0.0
    %96 = vmatpush1.msra.mxu0 0.0
    %97 = vmatprep.subr.mxu0 0.0
    %98 = vmatpush1.msra.mxu0 0.0
    %99 = vmatprep.subr.mxu0 0.0
    %100 = vmatpush1.msra.mxu0 0.0
    %101 = vmatprep.subr.mxu0 0.0
    %102 = vmatpush1.msra.mxu0 0.0
    %103 = vmatprep.subr.mxu0 0.0
    %104 = vmatpush1.msra.mxu0 0.0
    %105 = vmatprep.subr.mxu0 0.0
    %106 = vmatpush1.msra.mxu0 0.0
    %107 = vmatprep.subr.mxu0 0.0
    %108 = vmatpush1.msra.mxu0 0.0
    %109 = vmatprep.subr.mxu0 0.0
    %110 = vmatpush1.msra.mxu0 0.0
    %111 = vmatprep.subr.mxu0 0.0
    %112 = vmatpush1.msra.mxu0 0.0
    %113 = vmatprep.subr.mxu0 0.0
    %114 = vmatpush1.msra.mxu0 0.0
    %115 = vmatprep.subr.mxu0 0.0
    %116 = vmatpush1.msra.mxu0 0.0
    %117 = vmatprep.subr.mxu0 0.0
    %118 = vmatpush1.msra.mxu0 0.0
    %119 = vmatprep.subr.mxu0 0.0
    %120 = vmatpush1.msra.mxu0 0.0
    %121 = vmatprep.subr.mxu0 0.0
    %122 = vmatpush1.msra.mxu0 0.0
    %123 = vmatprep.subr.mxu0 0.0
    %124 = vmatpush1.msra.mxu0 0.0
    %125 = vmatprep.subr.mxu0 0.0
    %126 = vmatpush1.msra.mxu0 0.0
    %127 = vmatprep.subr.mxu0 0.0
    %128 = vmatpush1.msra.mxu0 0.0
    %129 = vmatprep.subr.mxu0 0.0
    %130 = vmatpush1.msra.mxu0 0.0
    %131 = vmatprep.subr.mxu0 0.0
    %132 = vmatpush1.msra.mxu0 0.0
    %133 = vmatprep.subr.mxu0 0.0
    %134 = vmatpush1.msra.mxu0 0.0
    %135 = vmatprep.subr.mxu0 0.0
    %136 = vmatpush1.msra.mxu0 0.0
    %137 = vmatprep.subr.mxu0 0.0
    %138 = vmatpush1.msra.mxu0 0.0
    %139 = vmatprep.subr.mxu0 0.0
    %140 = vmatpush1.msra.mxu0 0.0
    %141 = vmatprep.subr.mxu0 0.0
    %142 = vmatpush1.msra.mxu0 0.0
    %143 = vmatprep.subr.mxu0 0.0
    %144 = vmatpush1.msra.mxu0 0.0
    %145 = vmatprep.subr.mxu0 0.0
    %146 = vmatpush1.msra.mxu0 0.0
    %147 = vmatprep.mubr.f32.mxu0 0.0
    %148 = vmatmul.mubr.f32.gmra.mrb[0].mxu0 %v81
    %v149 = vpop.f32.mrb[0].mxu0
    %v150 = vadd.f32 %v72, %v149
    %v151 = vpop.f32.mrb[0].mxu0
    %v152 = vadd.f32 %v76, %v151
    %153 = vdwg.mxu0
    %v154 = vtanh.pop %v152
    %v155 = vld [vmem:[#allocation8 + $0x2] ss:$0 sm:$0xff]
    %v156 = vmul.f32 %v155, %v154
    %v157 = vadd.f32 %v150, %v156
    %158 = vst.msk [vmem:[#allocation9] sm:$0xff] %vm79, %v157
    // Predicated region
    $region30: #{tpu_custom_call.1} parent=1 // pred_check
      _
    $region31: #{tpu_custom_call.1} parent=1 // pred_check_branch
      %160 = sbr.rel (0) target = $region33
    $region32: #{tpu_custom_call.1} parent=1 // pred_region
      %s162 = ssub.s32 128, 128
      %163 = vsyncadd [#allocation5], %s162
      %s165 = sshll.u32 [#allocation9], 4
      %s166 = int_to_ptr.vmem [resolvable:$true] %s165
      %168 = dma.vmem_to_hbm [thread:$0]  %s166, 128, %s4, [#allocation5]
    $region33: #{tpu_custom_call.1} parent=1 // pred_fallthru
      _
    // Predicated region
    $region34: #{tpu_custom_call.1} parent=1 // pred_check
      _
    $region35: #{tpu_custom_call.1} parent=1 // pred_check_branch
      %170 = sbr.rel (0) target = $region37
    $region36: #{tpu_custom_call.1} parent=1 // pred_region
      %171 = dma.done [#allocation5], 128
    $region37: #{tpu_custom_call.1} parent=1 // pred_fallthru
      _
    %172 = vsyncpa [#allocation4], 1
    %173 = vsyncpa [#allocation7], 1
    %174 = vsyncpa [#allocation5], 1

</llo_original>
